<compile_context>
chip_gen: v5e
topology: v5e:2x2
jax: 0.10.0
libtpu: 0.0.40
codegen_flags: <defaults>
</compile_context>

<pallas_src>
import jax
import jax.numpy as jnp
from jax.experimental import pallas as pl
from jax.experimental.pallas import tpu as pltpu

EPS = 1e-5


def _round_up(n, m):
    return ((n + m - 1) // m) * m


def _device_vmem_capacity():
    try:
        return int(pltpu.get_tpu_info().vmem_capacity_bytes)
    except Exception:
        return 64 << 20  # conservative (v7x); v5e/v6e have 128 MiB


def qnet_kernel(x_ref,
                w1_ref, b1_ref, g1_ref, be1_ref,
                w2_ref, b2_ref, g2_ref, be2_ref,
                w3_ref, b3_ref, n_ref, out_ref):
    n = n_ref[0, 0]                                  # true batch rows (SMEM scalar)
    inv_n = 1.0 / n.astype(jnp.float32)

    def relu_mask_bn(h, gamma, beta):
        # Row-validity mask built at the shape it is consumed (VPU iota+compare).
        valid = jax.lax.broadcasted_iota(jnp.int32, h.shape, 0) < n
        h = jnp.where(valid, jnp.maximum(h, 0.0), 0.0)   # ReLU; padded rows -> 0
        # Training-mode BatchNorm1d, two-pass statistics (closer to PyTorch fp32).
        mean = jnp.sum(h, axis=0, keepdims=True) * inv_n
        diff = jnp.where(valid, h - mean, 0.0)
        var = jnp.sum(diff * diff, axis=0, keepdims=True) * inv_n   # biased var
        inv_std = jax.lax.rsqrt(var + EPS)                          # EUP
        # Padded feature lanes stay 0 because gamma/beta are zero-padded.
        return (h - mean) * (inv_std * gamma) + beta

    x = x_ref[...].astype(jnp.bfloat16)              # cast in-kernel (no wrapper pad/cast)

    # ---- layer 1: Linear -> ReLU -> BatchNorm1d (bf16 MXU, f32 accumulate) -----
    h1 = jnp.dot(x, w1_ref[...], preferred_element_type=jnp.float32) + b1_ref[...]
    h1 = relu_mask_bn(h1, g1_ref[...], be1_ref[...])

    # ---- layer 2: Linear -> ReLU -> BatchNorm1d ---------------------------------
    h2 = jnp.dot(h1.astype(jnp.bfloat16), w2_ref[...],
                 preferred_element_type=jnp.float32) + b2_ref[...]
    h2 = relu_mask_bn(h2, g2_ref[...], be2_ref[...])

    # ---- layer 3: Linear(d_h2 -> 1) -> ReLU, in f32 -----------------------------
    # Tiny output dim: multiply + lane reduction (XLU) instead of a 128-lane padded
    # matmul; output is a narrow (Bp, 1) column (minimal HBM writeback).
    q = jnp.sum(h2 * w3_ref[...], axis=1, keepdims=True) + b3_ref[0, 0]
    out_ref[...] = jnp.maximum(q, 0.0)


@jax.jit
def _qnet_padded_call(x_p, n_arr, prepared):
    (w1_p, b1_p, g1_p, be1_p, w2_p, b2_p, g2_p, be2_p, w3_p, b3_p) = prepared
    Bp, d_in = x_p.shape
    d_h1_p = w1_p.shape[1]
    d_h2_p = w2_p.shape[1]

    vmem = pl.BlockSpec(memory_space=pltpu.MemorySpace.VMEM)
    smem = pl.BlockSpec(memory_space=pltpu.MemorySpace.SMEM)

    # Advisory cost estimate (upper bound using padded batch).
    flops = 2 * Bp * (d_in * d_h1_p + d_h1_p * d_h2_p + d_h2_p)
    bytes_accessed = (x_p.size * 4 + w1_p.size * 2 + w2_p.size * 2
                      + (b1_p.size + g1_p.size + be1_p.size
                         + b2_p.size + g2_p.size + be2_p.size
                         + w3_p.size + b3_p.size) * 4
                      + Bp * 4 + 4)

    # Tight scoped-VMEM budget: resident operands + live intermediates, modest
    # headroom.  No 16 MiB floor, no blanket 2x.  Gated on device VMEM (v7x=64MiB).
    inter_bytes = Bp * (2 * d_in + 10 * d_h1_p + 10 * d_h2_p + 16)
    need = bytes_accessed + inter_bytes
    budget = int(0.9 * _device_vmem_capacity())
    if need > budget:
        # TODO(synk): batch-tiled BN-accumulation scheme instead of failing here.
        raise ValueError(
            f"Q_Network batch too large for whole-batch-resident kernel: "
            f"~{need} B of VMEM needed, budget {budget} B.")
    vmem_limit = min(max(int(need * 1.5) + (2 << 20), 4 << 20), budget)

    return pl.pallas_call(
        qnet_kernel,
        out_shape=jax.ShapeDtypeStruct((Bp, 1), jnp.float32),
        in_specs=[vmem] * 10 + [smem, smem],
        out_specs=vmem,
        compiler_params=pltpu.CompilerParams(vmem_limit_bytes=int(vmem_limit)),
        cost_estimate=pl.CostEstimate(flops=int(flops),
                                      transcendentals=int(d_h1_p + d_h2_p),
                                      bytes_accessed=int(bytes_accessed)),
    )(x_p, w1_p, b1_p, g1_p, be1_p, w2_p, b2_p, g2_p, be2_p, w3_p, b3_p, n_arr)


def prepare_params(params):
    """Pad/cast the Q_Network parameters ONCE into the kernel layout.

    Weights -> bf16 with output-feature dims padded to 128 lanes; bias / BN
    gamma / beta stay f32 and are ZERO-padded (the zero gamma/beta padding is
    what keeps padded feature lanes exactly 0 through BatchNorm -- keep it).
    Call once, reuse the returned pytree across forward calls.
    """
    (w1, b1, g1, be1, w2, b2, g2, be2, w3, b3) = params
    d_in, d_h1 = w1.shape
    d_h2 = w2.shape[1]
    d_h1_p = _round_up(d_h1, 128)
    d_h2_p = _round_up(d_h2, 128)

    def pad2(a, rows, cols, dtype):
        a = jnp.asarray(a, dtype)
        return jnp.pad(a, ((0, rows - a.shape[0]), (0, cols - a.shape[1])))

    return (
        pad2(w1, d_in, d_h1_p, jnp.bfloat16),               # K kept unpadded (matches x)
        pad2(b1, 1, d_h1_p, jnp.float32),
        pad2(g1, 1, d_h1_p, jnp.float32),
        pad2(be1, 1, d_h1_p, jnp.float32),
        pad2(w2, d_h1_p, d_h2_p, jnp.bfloat16),
        pad2(b2, 1, d_h2_p, jnp.float32),
        pad2(g2, 1, d_h2_p, jnp.float32),
        pad2(be2, 1, d_h2_p, jnp.float32),
        pad2(jnp.asarray(w3).reshape(1, d_h2), 1, d_h2_p, jnp.float32),  # (1, d_h2_p) row
        jnp.asarray(b3, jnp.float32).reshape(1, 1),
    )


def q_network_forward(x, prepared_params, *, batch_bucket=8):
    """Q_Network forward.  `prepared_params` comes from `prepare_params` (built once).

    Bp is bucketed to a multiple of `batch_bucket` (>= 8) and the true row count is
    passed as an SMEM scalar, so all batch sizes in a bucket share one executable.
    Use a coarser bucket (e.g. powers of two) if batch sizes vary a lot.
    """
    B = x.shape[0]
    if B < 2:
        # PyTorch BatchNorm1d raises on batch size 1 in training mode.
        raise ValueError("Q_Network forward (train-mode BatchNorm) needs batch >= 2.")
    bucket = max(8, int(batch_bucket))
    Bp = _round_up(B, bucket)
    x_p = jnp.asarray(x, jnp.float32)
    if Bp != B:
        x_p = jnp.pad(x_p, ((0, Bp - B), (0, 0)))   # rows only; no lane pad / cast round trip
    n_arr = jnp.full((1, 1), B, jnp.int32)
    out_p = _qnet_padded_call(x_p, n_arr, prepared_params)
    return out_p[:B]


def init_params(key, sequence_len, alphabet_len):
    """Deterministic synthetic init mirroring the PyTorch module's shapes."""
    d_in = 2 * alphabet_len * sequence_len
    d_h1 = alphabet_len * sequence_len
    d_h2 = sequence_len

    def linear(k, fan_in, fan_out):
        kw, kb = jax.random.split(k)
        bound = 1.0 / jnp.sqrt(float(fan_in))
        w = jax.random.uniform(kw, (fan_in, fan_out), jnp.float32, -bound, bound)
        b = jax.random.uniform(kb, (1, fan_out), jnp.float32, -bound, bound)
        return w, b

    k1, k2, k3 = jax.random.split(key, 3)
    w1, b1 = linear(k1, d_in, d_h1)
    w2, b2 = linear(k2, d_h1, d_h2)
    w3, b3 = linear(k3, d_h2, 1)

    # BatchNorm affine params at their PyTorch init (gamma=1, beta=0).
    g1, be1 = jnp.ones((1, d_h1), jnp.float32), jnp.zeros((1, d_h1), jnp.float32)
    g2, be2 = jnp.ones((1, d_h2), jnp.float32), jnp.zeros((1, d_h2), jnp.float32)
    return (w1, b1, g1, be1, w2, b2, g2, be2, w3, b3)


def reference_forward(x, params):
    """Module forward in plain JAX with the kernel's mixed precision (bf16 matmul
    operands for layers 1-2, f32 accumulation, f32 train-mode two-pass BatchNorm,
    f32 final layer)."""
    (w1, b1, g1, be1, w2, b2, g2, be2, w3, b3) = params

    def dot_bf16(a, w):
        return jnp.dot(a.astype(jnp.bfloat16), w.astype(jnp.bfloat16),
                       preferred_element_type=jnp.float32)

    def bn(h, gamma, beta):
        mean = jnp.mean(h, axis=0, keepdims=True)
        var = jnp.mean((h - mean) ** 2, axis=0, keepdims=True)
        return (h - mean) * (jax.lax.rsqrt(var + EPS) * gamma) + beta

    h1 = bn(jnp.maximum(dot_bf16(x, w1) + b1, 0.0), g1, be1)
    h2 = bn(jnp.maximum(dot_bf16(h1, w2) + b2, 0.0), g2, be2)
    q = jnp.dot(h2, jnp.asarray(w3, jnp.float32)) + b3
    return jnp.maximum(q, 0.0)


if __name__ == "__main__":
    sequence_len = 8
    alphabet_len = 4
    batch = 5   # not a multiple of 8 -> exercises the in-kernel row masking

    key = jax.random.PRNGKey(0)
    k_params, k_x = jax.random.split(key)

    raw_params = init_params(k_params, sequence_len, alphabet_len)
    prepared = prepare_params(raw_params)          # padded/cast ONCE, reused per call
    x = jax.random.normal(k_x, (batch, 2 * alphabet_len * sequence_len), jnp.float32)

    out = q_network_forward(x, prepared)
    out = jax.block_until_ready(out)

    ref = reference_forward(x, raw_params)
    assert out.shape == (batch, 1)
    assert jnp.allclose(out, ref, atol=1e-3, rtol=1e-3), (out, ref)

    print("KERNEL_OK")
</pallas_src>

<mosaic_0001>
module attributes {stable_mosaic.version = 11 : i64} {
  func.func @qnet_kernel(%arg0: memref<8x64xf32, #tpu.memory_space<vmem>>, %arg1: memref<64x128xbf16, #tpu.memory_space<vmem>>, %arg2: memref<1x128xf32, #tpu.memory_space<vmem>>, %arg3: memref<1x128xf32, #tpu.memory_space<vmem>>, %arg4: memref<1x128xf32, #tpu.memory_space<vmem>>, %arg5: memref<128x128xbf16, #tpu.memory_space<vmem>>, %arg6: memref<1x128xf32, #tpu.memory_space<vmem>>, %arg7: memref<1x128xf32, #tpu.memory_space<vmem>>, %arg8: memref<1x128xf32, #tpu.memory_space<vmem>>, %arg9: memref<1x128xf32, #tpu.memory_space<vmem>>, %arg10: memref<1x1xf32, #tpu.memory_space<smem>>, %arg11: memref<1x1xi32, #tpu.memory_space<smem>>, %arg12: memref<8x1xf32, #tpu.memory_space<vmem>>) attributes {dimension_semantics = [], scalar_prefetch = 0 : i64, scratch_operands = 0 : i64, tpu.core_type = #tpu.core_type<tc>} {
    %c0 = arith.constant 0 : index
    %c0_0 = arith.constant 0 : index
    %0 = memref.load %arg11[%c0, %c0_0] : memref<1x1xi32, #tpu.memory_space<smem>>
    %1 = arith.sitofp %0 : i32 to f32
    %cst = arith.constant 1.000000e+00 : f32
    %2 = arith.divf %cst, %1 : f32
    %c0_1 = arith.constant 0 : index
    %c0_2 = arith.constant 0 : index
    %3 = vector.load %arg0[%c0_1, %c0_2] : memref<8x64xf32, #tpu.memory_space<vmem>>, vector<8x64xf32>
    %4 = arith.truncf %3 : vector<8x64xf32> to vector<8x64xbf16>
    %c0_3 = arith.constant 0 : index
    %c0_4 = arith.constant 0 : index
    %5 = vector.load %arg1[%c0_3, %c0_4] : memref<64x128xbf16, #tpu.memory_space<vmem>>, vector<64x128xbf16>
    %cst_5 = arith.constant dense<0.000000e+00> : vector<8x128xf32>
    %6 = tpu.matmul %4, %5, %cst_5 {dimension_numbers = #tpu.dot_dimension_numbers<[1], [0], [0], [1], [0, 0, 1, 1], [], []>} : vector<8x64xbf16>, vector<64x128xbf16>, vector<8x128xf32> -> vector<8x128xf32>
    %c0_6 = arith.constant 0 : index
    %c0_7 = arith.constant 0 : index
    %7 = vector.load %arg2[%c0_6, %c0_7] : memref<1x128xf32, #tpu.memory_space<vmem>>, vector<1x128xf32>
    %8 = vector.broadcast %7 : vector<1x128xf32> to vector<8x128xf32>
    %9 = arith.addf %6, %8 : vector<8x128xf32>
    %c0_8 = arith.constant 0 : index
    %c0_9 = arith.constant 0 : index
    %10 = vector.load %arg3[%c0_8, %c0_9] : memref<1x128xf32, #tpu.memory_space<vmem>>, vector<1x128xf32>
    %c0_10 = arith.constant 0 : index
    %c0_11 = arith.constant 0 : index
    %11 = vector.load %arg4[%c0_10, %c0_11] : memref<1x128xf32, #tpu.memory_space<vmem>>, vector<1x128xf32>
    %12 = tpu.iota {dimensions = array<i32: 0>} : vector<8x128xi32>
    %13 = vector.broadcast %0 : i32 to vector<8x128xi32>
    %14 = arith.cmpi slt, %12, %13 : vector<8x128xi32>
    %cst_12 = arith.constant 0.000000e+00 : f32
    %15 = vector.broadcast %cst_12 : f32 to vector<8x128xf32>
    %16 = arith.maximumf %9, %15 : vector<8x128xf32>
    %cst_13 = arith.constant 0.000000e+00 : f32
    %17 = vector.broadcast %cst_13 : f32 to vector<8x128xf32>
    %18 = arith.select %14, %16, %17 : vector<8x128xi1>, vector<8x128xf32>
    %cst_14 = arith.constant dense<0.000000e+00> : vector<128xf32>
    %19 = vector.multi_reduction <add>, %18, %cst_14 [0] : vector<8x128xf32> to vector<128xf32>
    %20 = vector.shape_cast %19 : vector<128xf32> to vector<1x128xf32>
    %21 = vector.broadcast %2 : f32 to vector<1x128xf32>
    %22 = arith.mulf %20, %21 : vector<1x128xf32>
    %23 = vector.broadcast %22 : vector<1x128xf32> to vector<8x128xf32>
    %24 = arith.subf %18, %23 : vector<8x128xf32>
    %cst_15 = arith.constant 0.000000e+00 : f32
    %25 = vector.broadcast %cst_15 : f32 to vector<8x128xf32>
    %26 = arith.select %14, %24, %25 : vector<8x128xi1>, vector<8x128xf32>
    %27 = arith.mulf %26, %26 : vector<8x128xf32>
    %cst_16 = arith.constant dense<0.000000e+00> : vector<128xf32>
    %28 = vector.multi_reduction <add>, %27, %cst_16 [0] : vector<8x128xf32> to vector<128xf32>
    %29 = vector.shape_cast %28 : vector<128xf32> to vector<1x128xf32>
    %30 = vector.broadcast %2 : f32 to vector<1x128xf32>
    %31 = arith.mulf %29, %30 : vector<1x128xf32>
    %cst_17 = arith.constant 9.99999974E-6 : f32
    %32 = vector.broadcast %cst_17 : f32 to vector<1x128xf32>
    %33 = arith.addf %31, %32 : vector<1x128xf32>
    %34 = math.rsqrt %33 : vector<1x128xf32>
    %35 = vector.broadcast %22 : vector<1x128xf32> to vector<8x128xf32>
    %36 = arith.subf %18, %35 : vector<8x128xf32>
    %37 = arith.mulf %34, %10 : vector<1x128xf32>
    %38 = vector.broadcast %37 : vector<1x128xf32> to vector<8x128xf32>
    %39 = arith.mulf %36, %38 : vector<8x128xf32>
    %40 = vector.broadcast %11 : vector<1x128xf32> to vector<8x128xf32>
    %41 = arith.addf %39, %40 : vector<8x128xf32>
    %42 = arith.truncf %41 : vector<8x128xf32> to vector<8x128xbf16>
    %c0_18 = arith.constant 0 : index
    %c0_19 = arith.constant 0 : index
    %43 = vector.load %arg5[%c0_18, %c0_19] : memref<128x128xbf16, #tpu.memory_space<vmem>>, vector<128x128xbf16>
    %cst_20 = arith.constant dense<0.000000e+00> : vector<8x128xf32>
    %44 = tpu.matmul %42, %43, %cst_20 {dimension_numbers = #tpu.dot_dimension_numbers<[1], [0], [0], [1], [0, 0, 1, 1], [], []>} : vector<8x128xbf16>, vector<128x128xbf16>, vector<8x128xf32> -> vector<8x128xf32>
    %c0_21 = arith.constant 0 : index
    %c0_22 = arith.constant 0 : index
    %45 = vector.load %arg6[%c0_21, %c0_22] : memref<1x128xf32, #tpu.memory_space<vmem>>, vector<1x128xf32>
    %46 = vector.broadcast %45 : vector<1x128xf32> to vector<8x128xf32>
    %47 = arith.addf %44, %46 : vector<8x128xf32>
    %c0_23 = arith.constant 0 : index
    %c0_24 = arith.constant 0 : index
    %48 = vector.load %arg7[%c0_23, %c0_24] : memref<1x128xf32, #tpu.memory_space<vmem>>, vector<1x128xf32>
    %c0_25 = arith.constant 0 : index
    %c0_26 = arith.constant 0 : index
    %49 = vector.load %arg8[%c0_25, %c0_26] : memref<1x128xf32, #tpu.memory_space<vmem>>, vector<1x128xf32>
    %50 = tpu.iota {dimensions = array<i32: 0>} : vector<8x128xi32>
    %51 = vector.broadcast %0 : i32 to vector<8x128xi32>
    %52 = arith.cmpi slt, %50, %51 : vector<8x128xi32>
    %cst_27 = arith.constant 0.000000e+00 : f32
    %53 = vector.broadcast %cst_27 : f32 to vector<8x128xf32>
    %54 = arith.maximumf %47, %53 : vector<8x128xf32>
    %cst_28 = arith.constant 0.000000e+00 : f32
    %55 = vector.broadcast %cst_28 : f32 to vector<8x128xf32>
    %56 = arith.select %52, %54, %55 : vector<8x128xi1>, vector<8x128xf32>
    %cst_29 = arith.constant dense<0.000000e+00> : vector<128xf32>
    %57 = vector.multi_reduction <add>, %56, %cst_29 [0] : vector<8x128xf32> to vector<128xf32>
    %58 = vector.shape_cast %57 : vector<128xf32> to vector<1x128xf32>
    %59 = vector.broadcast %2 : f32 to vector<1x128xf32>
    %60 = arith.mulf %58, %59 : vector<1x128xf32>
    %61 = vector.broadcast %60 : vector<1x128xf32> to vector<8x128xf32>
    %62 = arith.subf %56, %61 : vector<8x128xf32>
    %cst_30 = arith.constant 0.000000e+00 : f32
    %63 = vector.broadcast %cst_30 : f32 to vector<8x128xf32>
    %64 = arith.select %52, %62, %63 : vector<8x128xi1>, vector<8x128xf32>
    %65 = arith.mulf %64, %64 : vector<8x128xf32>
    %cst_31 = arith.constant dense<0.000000e+00> : vector<128xf32>
    %66 = vector.multi_reduction <add>, %65, %cst_31 [0] : vector<8x128xf32> to vector<128xf32>
    %67 = vector.shape_cast %66 : vector<128xf32> to vector<1x128xf32>
    %68 = vector.broadcast %2 : f32 to vector<1x128xf32>
    %69 = arith.mulf %67, %68 : vector<1x128xf32>
    %cst_32 = arith.constant 9.99999974E-6 : f32
    %70 = vector.broadcast %cst_32 : f32 to vector<1x128xf32>
    %71 = arith.addf %69, %70 : vector<1x128xf32>
    %72 = math.rsqrt %71 : vector<1x128xf32>
    %73 = vector.broadcast %60 : vector<1x128xf32> to vector<8x128xf32>
    %74 = arith.subf %56, %73 : vector<8x128xf32>
    %75 = arith.mulf %72, %48 : vector<1x128xf32>
    %76 = vector.broadcast %75 : vector<1x128xf32> to vector<8x128xf32>
    %77 = arith.mulf %74, %76 : vector<8x128xf32>
    %78 = vector.broadcast %49 : vector<1x128xf32> to vector<8x128xf32>
    %79 = arith.addf %77, %78 : vector<8x128xf32>
    %c0_33 = arith.constant 0 : index
    %c0_34 = arith.constant 0 : index
    %80 = vector.load %arg9[%c0_33, %c0_34] : memref<1x128xf32, #tpu.memory_space<vmem>>, vector<1x128xf32>
    %81 = vector.broadcast %80 : vector<1x128xf32> to vector<8x128xf32>
    %82 = arith.mulf %79, %81 : vector<8x128xf32>
    %cst_35 = arith.constant dense<0.000000e+00> : vector<8xf32>
    %83 = vector.multi_reduction <add>, %82, %cst_35 [1] : vector<8x128xf32> to vector<8xf32>
    %84 = vector.shape_cast %83 : vector<8xf32> to vector<8x1xf32>
    %c0_36 = arith.constant 0 : index
    %c0_37 = arith.constant 0 : index
    %85 = memref.load %arg10[%c0_36, %c0_37] : memref<1x1xf32, #tpu.memory_space<smem>>
    %86 = vector.broadcast %85 : f32 to vector<8x1xf32>
    %87 = arith.addf %84, %86 : vector<8x1xf32>
    %cst_38 = arith.constant 0.000000e+00 : f32
    %88 = vector.broadcast %cst_38 : f32 to vector<8x1xf32>
    %89 = arith.maximumf %87, %88 : vector<8x1xf32>
    %c0_39 = arith.constant 0 : index
    %c0_40 = arith.constant 0 : index
    %90 = vector.load %arg12[%c0_39, %c0_40] : memref<8x1xf32, #tpu.memory_space<vmem>>, vector<8x1xf32>
    tpu.vector_store %arg12[%c0_39, %c0_40], %89 {strides = array<i32>} : memref<8x1xf32, #tpu.memory_space<vmem>>, vector<8x1xf32>,
    return
  }
}

</mosaic_0001>

<llo_original>
// kernel: _qnet_padded_call.1
$region0: #{_qnet_padded_call.1}
  #allocation0 [shape = 'u32[]', space=smem, size = 0x4, offset = 0x4, fixed_abs, tag = 'smem constant byte address 0x4 - core index']
  #allocation1 [shape = 'u32[72,128]{1,0:T(1,128)}', space=vmem, size = 0x9000, scoped, tag = 'internal scratch']
  #allocation2 [shape = 'f32[1,1]{1,0:T(1,128)S(6)}', space=smem, size = 0x200, scoped, tag = 'scoped memory for _qnet_padded_call.1']
  #allocation3 [shape = 's32[1,1]{1,0:T(1,128)S(6)}', space=smem, size = 0x200, scoped, tag = 'scoped memory for _qnet_padded_call.1']
  %s0 = inlined_call_operand.hbm [shape: f32[8,64], index: 0, kind: input, shape index: {}]
  %s1 = inlined_call_operand.hbm [shape: bf16[64,128], index: 1, kind: input, shape index: {}]
  %s2 = inlined_call_operand.vmem [shape: f32[1,128], index: 2, kind: input, shape index: {}]
  %s3 = inlined_call_operand.vmem [shape: f32[1,128], index: 3, kind: input, shape index: {}]
  %s4 = inlined_call_operand.vmem [shape: f32[1,128], index: 4, kind: input, shape index: {}]
  %s5 = inlined_call_operand.hbm [shape: bf16[128,128], index: 5, kind: input, shape index: {}]
  %s6 = inlined_call_operand.vmem [shape: f32[1,128], index: 6, kind: input, shape index: {}]
  %s7 = inlined_call_operand.vmem [shape: f32[1,128], index: 7, kind: input, shape index: {}]
  %s8 = inlined_call_operand.vmem [shape: f32[1,128], index: 8, kind: input, shape index: {}]
  %s9 = inlined_call_operand.vmem [shape: f32[1,128], index: 9, kind: input, shape index: {}]
  %s10 = inlined_call_operand.<no memory space> [shape: f32[1,1], index: 10, kind: input, shape index: {}]
  %s11 = inlined_call_operand.<no memory space> [shape: s32[1,1], index: 11, kind: input, shape index: {}]
  %s12 = inlined_call_operand.vmem [shape: f32[8,1], index: 12, kind: output, shape index: {}]
  %s13 = sld [smem:[#allocation0]]
  $region70: #{_qnet_padded_call.1} parent=0
    _
  %s15 = ssub.s32 1, %s13
  %s16 = scalar_select 0, %s15, %s13
  %17 = sst [smem:[#allocation2]] %s10
  %18 = sst [smem:[#allocation3]] %s11
  $region1: #{_qnet_padded_call.1} parent=0
    #allocation4 [shape = 'u8[4096]{0}', space=vmem, size = 0x1000, scoped, tag = 'input window, operand 0, single buffered']
    #allocation5 [shape = 's32[1]{0}', space=sflag, size = 0x4, scoped, tag = 'scoped memory for _qnet_padded_call.1']
    #allocation6 [shape = 'u8[16384]{0}', space=vmem, size = 0x4000, scoped, tag = 'input window, operand 1, single buffered']
    #allocation7 [shape = 's32[1]{0}', space=sflag, size = 0x4, scoped, tag = 'scoped memory for _qnet_padded_call.1']
    #allocation8 [shape = 'u8[32768]{0}', space=vmem, size = 0x8000, scoped, tag = 'input window, operand 5, single buffered']
    %19 = vsyncpa [#allocation5], 0
    %20 = vsyncpa [#allocation7], 0
    // Predicated region
    $region2: #{_qnet_padded_call.1} parent=1 // pred_check
      _
    $region3: #{_qnet_padded_call.1} parent=1 // pred_check_branch
      %22 = sbr.rel (0) target = $region5
    $region4: #{_qnet_padded_call.1} parent=1 // pred_region
      %24 = vsyncadd [#allocation5], 0
      %s26 = sshll.u32 %s0, 4
      %s27 = int_to_ptr.hbm [resolvable:$true] %s26
      %s28 = sshll.u32 [#allocation4], 4
      %s29 = int_to_ptr.vmem [resolvable:$true] %s28
      %31 = dma.hbm_to_vmem [thread:$0]  %s27, 128, %s29, [#allocation5]
    $region5: #{_qnet_padded_call.1} parent=1 // pred_fallthru
      _
    // Predicated region
    $region6: #{_qnet_padded_call.1} parent=1 // pred_check
      _
    $region7: #{_qnet_padded_call.1} parent=1 // pred_check_branch
      %33 = sbr.rel (0) target = $region9
    $region8: #{_qnet_padded_call.1} parent=1 // pred_region
      %35 = vsyncadd [#allocation7], 0
      %s36 = sshll.u32 %s1, 4
      %s37 = int_to_ptr.hbm [resolvable:$true] %s36
      %s38 = sshll.u32 [#allocation6], 4
      %s39 = int_to_ptr.vmem [resolvable:$true] %s38
      %44 = dma.hbm_to_vmem [thread:$0]  %s37, 512, %s39, [#allocation7], 64, 64, 4
    $region9: #{_qnet_padded_call.1} parent=1 // pred_fallthru
      _
    // Predicated region
    $region10: #{_qnet_padded_call.1} parent=1 // pred_check
      _
    $region11: #{_qnet_padded_call.1} parent=1 // pred_check_branch
      %46 = sbr.rel (0) target = $region13
    $region12: #{_qnet_padded_call.1} parent=1 // pred_region
      _
    $region13: #{_qnet_padded_call.1} parent=1 // pred_fallthru
      _
    // Predicated region
    $region14: #{_qnet_padded_call.1} parent=1 // pred_check
      _
    $region15: #{_qnet_padded_call.1} parent=1 // pred_check_branch
      %48 = sbr.rel (0) target = $region17
    $region16: #{_qnet_padded_call.1} parent=1 // pred_region
      _
    $region17: #{_qnet_padded_call.1} parent=1 // pred_fallthru
      _
    // Predicated region
    $region18: #{_qnet_padded_call.1} parent=1 // pred_check
      _
    $region19: #{_qnet_padded_call.1} parent=1 // pred_check_branch
      %50 = sbr.rel (0) target = $region21
    $region20: #{_qnet_padded_call.1} parent=1 // pred_region
      _
    $region21: #{_qnet_padded_call.1} parent=1 // pred_fallthru
      _
    // Predicated region
    $region22: #{_qnet_padded_call.1} parent=1 // pred_check
      _
    $region23: #{_qnet_padded_call.1} parent=1 // pred_check_branch
      %52 = sbr.rel (0) target = $region25
    $region24: #{_qnet_padded_call.1} parent=1 // pred_region
      %54 = vsyncadd [#allocation7], 0
      %s55 = sshll.u32 %s5, 4
      %s56 = int_to_ptr.hbm [resolvable:$true] %s55
      %s57 = sshll.u32 [#allocation8], 4
      %s58 = int_to_ptr.vmem [resolvable:$true] %s57
      %63 = dma.hbm_to_vmem [thread:$0]  %s56, 1024, %s58, [#allocation7], 64, 64, 4
    $region25: #{_qnet_padded_call.1} parent=1 // pred_fallthru
      _
    // Predicated region
    $region26: #{_qnet_padded_call.1} parent=1 // pred_check
      _
    $region27: #{_qnet_padded_call.1} parent=1 // pred_check_branch
      %65 = sbr.rel (0) target = $region29
    $region28: #{_qnet_padded_call.1} parent=1 // pred_region
      _
    $region29: #{_qnet_padded_call.1} parent=1 // pred_fallthru
      _
    // Predicated region
    $region30: #{_qnet_padded_call.1} parent=1 // pred_check
      _
    $region31: #{_qnet_padded_call.1} parent=1 // pred_check_branch
      %67 = sbr.rel (0) target = $region33
    $region32: #{_qnet_padded_call.1} parent=1 // pred_region
      _
    $region33: #{_qnet_padded_call.1} parent=1 // pred_fallthru
      _
    // Predicated region
    $region34: #{_qnet_padded_call.1} parent=1 // pred_check
      _
    $region35: #{_qnet_padded_call.1} parent=1 // pred_check_branch
      %69 = sbr.rel (0) target = $region37
    $region36: #{_qnet_padded_call.1} parent=1 // pred_region
      _
    $region37: #{_qnet_padded_call.1} parent=1 // pred_fallthru
      _
    // Predicated region
    $region38: #{_qnet_padded_call.1} parent=1 // pred_check
      _
    $region39: #{_qnet_padded_call.1} parent=1 // pred_check_branch
      %71 = sbr.rel (0) target = $region41
    $region40: #{_qnet_padded_call.1} parent=1 // pred_region
      _
    $region41: #{_qnet_padded_call.1} parent=1 // pred_fallthru
      _
    // Predicated region
    $region42: #{_qnet_padded_call.1} parent=1 // pred_check
      _
    $region43: #{_qnet_padded_call.1} parent=1 // pred_check_branch
      %73 = sbr.rel (0) target = $region45
    $region44: #{_qnet_padded_call.1} parent=1 // pred_region
      _
    $region45: #{_qnet_padded_call.1} parent=1 // pred_fallthru
      _
    // Predicated region
    $region46: #{_qnet_padded_call.1} parent=1 // pred_check
      _
    $region47: #{_qnet_padded_call.1} parent=1 // pred_check_branch
      %75 = sbr.rel (0) target = $region49
    $region48: #{_qnet_padded_call.1} parent=1 // pred_region
      _
    $region49: #{_qnet_padded_call.1} parent=1 // pred_fallthru
      _
    // Predicated region
    $region50: #{_qnet_padded_call.1} parent=1 // pred_check
      _
    $region51: #{_qnet_padded_call.1} parent=1 // pred_check_branch
      %77 = sbr.rel (0) target = $region53
    $region52: #{_qnet_padded_call.1} parent=1 // pred_region
      %79 = dma.done [#allocation5], 128
    $region53: #{_qnet_padded_call.1} parent=1 // pred_fallthru
      _
    // Predicated region
    $region54: #{_qnet_padded_call.1} parent=1 // pred_check
      _
    $region55: #{_qnet_padded_call.1} parent=1 // pred_check_branch
      %81 = sbr.rel (0) target = $region57
    $region56: #{_qnet_padded_call.1} parent=1 // pred_region
      %83 = dma.done [#allocation7], 512
    $region57: #{_qnet_padded_call.1} parent=1 // pred_fallthru
      _
    // Predicated region
    $region58: #{_qnet_padded_call.1} parent=1 // pred_check
      _
    $region59: #{_qnet_padded_call.1} parent=1 // pred_check_branch
      %85 = sbr.rel (0) target = $region61
    $region60: #{_qnet_padded_call.1} parent=1 // pred_region
      %87 = dma.done [#allocation7], 1024
    $region61: #{_qnet_padded_call.1} parent=1 // pred_fallthru
      _
    %s89 = sld [smem:[#allocation3]]
    %s90 = scvt.s32.f32 %s89
    %v91 = vstv %s90
    %v92 = vrcp.pop %v91
    %v93 = vmul.f32 %v91, %v92
    %v94 = vsub.f32 1.0, %v93
    %v95 = vmul.f32 %v92, %v94
    %v96 = vadd.f32 %v92, %v95
    %vm97 = vweird.f32 %v91
    %vm98 = vweird.f32 %v92
    %vm99 = vmor %vm97, %vm98
    %v100 = vsel %vm99, %v92, %v96
    %v101 = vand.u32 2147483647, %v91
    %vm102 = vcmp.eq.f32.partialorder %v101, 8.507059e+37
    %v103 = vand.u32 %v91, 2147483648
    %v104 = vor.u32 1.1754944e-38, %v103
    %v105 = vsel %vm102, %v104, %v100
    %s106 = vtos %v105
    %v107 = vld [vmem:[#allocation4] sm:$0xff]
    %v108 = vpack.c.bf16 %v107, %v107
    %v109 = vld [vmem:[#allocation6] sm:$0xf]
    %v110 = vld [vmem:[#allocation6 + $0x4] sm:$0xf]
    %v111 = vld [vmem:[#allocation6 + $0x8] sm:$0xf]
    %v112 = vld [vmem:[#allocation6 + $0xc] sm:$0xf]
    %v113 = vld [vmem:[#allocation6 + $0x10] sm:$0xf]
    %v114 = vld [vmem:[#allocation6 + $0x14] sm:$0xf]
    %v115 = vld [vmem:[#allocation6 + $0x18] sm:$0xf]
    %v116 = vld [vmem:[#allocation6 + $0x1c] sm:$0xf]
    %v117 = vld [vmem:[%s2] sm:$0x1]
    %v119 = vperm.slane %v117, 0
    %v129 = vunpack.c.l.b16 %v109
    %v130 = vunpack.c.l.b16 %v110
    %v131 = vunpack.c.l.b16 %v111
    %v132 = vunpack.c.l.b16 %v112
    %v133 = vunpack.c.l.b16 %v113
    %v134 = vunpack.c.l.b16 %v114
    %v135 = vunpack.c.l.b16 %v115
    %v136 = vunpack.c.l.b16 %v116
    %v137 = vpack.c.b16 %v130, %v129
    %v138 = vpack.c.b16 %v132, %v131
    %v139 = vpack.c.b16 %v134, %v133
    %v140 = vpack.c.b16 %v136, %v135
    %vm145 = vcmask 523264
    %v147 = vsel %vm145, %v108, 0
    %149 = vmatpush.bf16.msra.mxu0 0
    %150 = vmatpush.bf16.msra.mxu0 0
    %151 = vmatpush.bf16.msra.mxu0 0
    %152 = vmatpush.bf16.msra.mxu0 0
    %153 = vmatpush.bf16.msra.mxu0 %v140
    %154 = vmatpush.bf16.msra.mxu0 %v139
    %155 = vmatpush.bf16.msra.mxu0 %v138
    %156 = vmatpush.bf16.msra.mxu0 %v137
    %157 = vmatmul.bf16.gmra.mxu0 %v147
    %v158 = vpop.f32.mrf.mxu0
    %v159 = vadd.f32 %v119, %v158
    %v160 = vpop.f32.mrf.mxu0
    %161 = vdwg.mxu0
    %v162 = vld [vmem:[%s3] sm:$0x1]
    %v163 = vld [vmem:[%s4] sm:$0x1]
    %v164 = vlaneseq
    %v165 = vshrl.u32 %v164, 7
    %v166 = vstv %s89
    %vm167 = vcmp.lt.s32.totalorder %v165, %v166
    %v168 = vmax.f32 %v159, 0.0
    %v169 = vsel %vm167, %v168, 0.0
    %v170 = vrot.slane %v169, 4
    %v171 = vadd.f32 %v169, %v170
    %v172 = vrot.slane %v171, 2
    %v173 = vadd.f32 %v171, %v172
    %v174 = vrot.slane %v173, 1
    %v175 = vadd.f32 %v173, %v174
    %v176 = vstv %s106
    %v177 = vmul.f32 %v175, %v176
    %v178 = vsub.f32 %v169, %v177
    %v179 = vsel %vm167, %v178, 0.0
    %v180 = vmul.f32 %v179, %v179
    %v181 = vrot.slane %v180, 4
    %v182 = vadd.f32 %v180, %v181
    %v183 = vrot.slane %v182, 2
    %v184 = vadd.f32 %v182, %v183
    %v185 = vrot.slane %v184, 1
    %v186 = vadd.f32 %v184, %v185
    %v187 = vmul.f32 %v186, %v176
    %v188 = vadd.f32 %v187, 1e-05
    %v189 = vrsqrt.pop %v188
    %v190 = vmul.f32 %v189, %v188
    %v191 = vmul.f32 %v190, %v189
    %v192 = vmul.f32 0.5, %v191
    %v193 = vsub.f32 1.5, %v192
    %v194 = vmul.f32 %v189, %v193
    %vm195 = vweird.f32 %v188
    %vm196 = vweird.f32 %v189
    %vm197 = vmor %vm195, %vm196
    %v198 = vsel %vm197, %v189, %v194
    %v199 = vmul.f32 %v198, %v162
    %v200 = vperm.slane %v199, 0
    %v201 = vmul.f32 %v178, %v200
    %v203 = vperm.slane %v163, 0
    %v205 = vadd.f32 %v201, %v203
    %v206 = vpack.c.bf16 %v205, %v205
    %v207 = vld [vmem:[#allocation8] sm:$0xf]
    %v208 = vld [vmem:[#allocation8 + $0x4] sm:$0xf]
    %v209 = vld [vmem:[#allocation8 + $0x8] sm:$0xf]
    %v210 = vld [vmem:[#allocation8 + $0xc] sm:$0xf]
    %v211 = vld [vmem:[#allocation8 + $0x10] sm:$0xf]
    %v212 = vld [vmem:[#allocation8 + $0x14] sm:$0xf]
    %v213 = vld [vmem:[#allocation8 + $0x18] sm:$0xf]
    %v214 = vld [vmem:[#allocation8 + $0x1c] sm:$0xf]
    %v215 = vld [vmem:[#allocation8 + $0x20] sm:$0xf]
    %v216 = vld [vmem:[#allocation8 + $0x24] sm:$0xf]
    %v217 = vld [vmem:[#allocation8 + $0x28] sm:$0xf]
    %v218 = vld [vmem:[#allocation8 + $0x2c] sm:$0xf]
    %v219 = vld [vmem:[#allocation8 + $0x30] sm:$0xf]
    %v220 = vld [vmem:[#allocation8 + $0x34] sm:$0xf]
    %v221 = vld [vmem:[#allocation8 + $0x38] sm:$0xf]
    %v222 = vld [vmem:[#allocation8 + $0x3c] sm:$0xf]
    %v223 = vld [vmem:[%s6] sm:$0x1]
    %v225 = vperm.slane %v223, 0
    %v243 = vunpack.c.l.b16 %v207
    %v244 = vunpack.c.l.b16 %v208
    %v245 = vunpack.c.l.b16 %v209
    %v246 = vunpack.c.l.b16 %v210
    %v247 = vunpack.c.l.b16 %v211
    %v248 = vunpack.c.l.b16 %v212
    %v249 = vunpack.c.l.b16 %v213
    %v250 = vunpack.c.l.b16 %v214
    %v251 = vunpack.c.l.b16 %v215
    %v252 = vunpack.c.l.b16 %v216
    %v253 = vunpack.c.l.b16 %v217
    %v254 = vunpack.c.l.b16 %v218
    %v255 = vunpack.c.l.b16 %v219
    %v256 = vunpack.c.l.b16 %v220
    %v257 = vunpack.c.l.b16 %v221
    %v258 = vunpack.c.l.b16 %v222
    %v259 = vpack.c.b16 %v244, %v243
    %v260 = vpack.c.b16 %v246, %v245
    %v261 = vpack.c.b16 %v248, %v247
    %v262 = vpack.c.b16 %v250, %v249
    %v263 = vpack.c.b16 %v252, %v251
    %v264 = vpack.c.b16 %v254, %v253
    %v265 = vpack.c.b16 %v256, %v255
    %v266 = vpack.c.b16 %v258, %v257
    %275 = vmatpush.bf16.msra.mxu0 %v266
    %276 = vmatpush.bf16.msra.mxu0 %v265
    %277 = vmatpush.bf16.msra.mxu0 %v264
    %278 = vmatpush.bf16.msra.mxu0 %v263
    %279 = vmatpush.bf16.msra.mxu0 %v262
    %280 = vmatpush.bf16.msra.mxu0 %v261
    %281 = vmatpush.bf16.msra.mxu0 %v260
    %282 = vmatpush.bf16.msra.mxu0 %v259
    %283 = vmatmul.bf16.gmra.mxu0 %v206
    %v284 = vpop.f32.mrf.mxu0
    %v285 = vadd.f32 %v225, %v284
    %v286 = vpop.f32.mrf.mxu0
    %287 = vdwg.mxu0
    %v288 = vld [vmem:[%s7] sm:$0x1]
    %v289 = vld [vmem:[%s8] sm:$0x1]
    %v290 = vmax.f32 %v285, 0.0
    %v291 = vsel %vm167, %v290, 0.0
    %v292 = vrot.slane %v291, 4
    %v293 = vadd.f32 %v291, %v292
    %v294 = vrot.slane %v293, 2
    %v295 = vadd.f32 %v293, %v294
    %v296 = vrot.slane %v295, 1
    %v297 = vadd.f32 %v295, %v296
    %v298 = vmul.f32 %v297, %v176
    %v299 = vsub.f32 %v291, %v298
    %v300 = vsel %vm167, %v299, 0.0
    %v301 = vmul.f32 %v300, %v300
    %v302 = vrot.slane %v301, 4
    %v303 = vadd.f32 %v301, %v302
    %v304 = vrot.slane %v303, 2
    %v305 = vadd.f32 %v303, %v304
    %v306 = vrot.slane %v305, 1
    %v307 = vadd.f32 %v305, %v306
    %v308 = vmul.f32 %v307, %v176
    %v309 = vadd.f32 %v308, 1e-05
    %v310 = vrsqrt.pop %v309
    %v311 = vmul.f32 %v310, %v309
    %v312 = vmul.f32 %v311, %v310
    %v313 = vmul.f32 0.5, %v312
    %v314 = vsub.f32 1.5, %v313
    %v315 = vmul.f32 %v310, %v314
    %vm316 = vweird.f32 %v309
    %vm317 = vweird.f32 %v310
    %vm318 = vmor %vm316, %vm317
    %v319 = vsel %vm318, %v310, %v315
    %v320 = vmul.f32 %v319, %v288
    %v321 = vperm.slane %v320, 0
    %v322 = vmul.f32 %v299, %v321
    %v324 = vperm.slane %v289, 0
    %v326 = vadd.f32 %v322, %v324
    %v327 = vld [vmem:[%s9] sm:$0x1]
    %v329 = vperm.slane %v327, 0
    %v331 = vmul.f32 %v326, %v329
    %332 = vadd.xlane.f32.xlu0 %v331
    %v333 = vpop.xlane.xlu0 %332
    %s334 = sld [smem:[#allocation2]]
    %v335 = vstv %s334
    %v336 = vadd.f32 %v333, %v335
    %v337 = vmax.f32 %v336, 0.0
    %vm338 = vcmask 7168
    %339 = vst.msk [vmem:[%s12] sm:$0xff] %vm338, %v337
    // Predicated region
    $region62: #{_qnet_padded_call.1} parent=1 // pred_check
      _
    $region63: #{_qnet_padded_call.1} parent=1 // pred_check_branch
      %341 = sbr.rel (0) target = $region65
    $region64: #{_qnet_padded_call.1} parent=1 // pred_region
      _
    $region65: #{_qnet_padded_call.1} parent=1 // pred_fallthru
      _
    // Predicated region
    $region66: #{_qnet_padded_call.1} parent=1 // pred_check
      _
    $region67: #{_qnet_padded_call.1} parent=1 // pred_check_branch
      %343 = sbr.rel (0) target = $region69
    $region68: #{_qnet_padded_call.1} parent=1 // pred_region
      _
    $region69: #{_qnet_padded_call.1} parent=1 // pred_fallthru
      _
    %344 = vsyncpa [#allocation5], 1
    %345 = vsyncpa [#allocation7], 1

</llo_original>
